<compile_context>
chip_gen: v5e
topology: v5e:2x2
jax: 0.10.0
libtpu: 0.0.40
codegen_flags: <defaults>
</compile_context>

<pallas_src>
import functools
import math

import jax
import jax.numpy as jnp
import numpy as np
from jax.experimental import pallas as pl
from jax.experimental.pallas import tpu as pltpu


def _dcl_kernel(z_ref, out_ref, *, num_trans: int, z_dim: int, temperature: float):
    """z_ref: (tb, T*D) VMEM block.  out_ref: (2, tb) lane-dense VMEM block."""
    T, D = num_trans, z_dim
    tb = z_ref.shape[0]
    inv_temp = jnp.float32(1.0 / temperature)
    K = T - 1
    # scale / K  (the /K folds in the mean over the K transformed views)
    coef = jnp.float32((1.0 / abs(math.log(1.0 / K))) / K)

    # One 2-D transpose puts the batch tile on the lane axis; everything after
    # this point is lane-dense.
    zt = jnp.transpose(z_ref[...].astype(jnp.float32), (1, 0))          # (T*D, tb)

    # Per-view (D, tb) slabs, L2-normalized over D (sublane reduce + EUP rsqrt).
    # torch.F.normalize: v / max(||v||, 1e-12)  ==  v * rsqrt(max(||v||^2, 1e-24))
    views = []
    for t in range(T):
        v = zt[t * D:(t + 1) * D, :]                                     # (D, tb)
        ssq = jnp.sum(v * v, axis=0, keepdims=True)                      # (1, tb)
        inv_norm = jax.lax.rsqrt(jnp.maximum(ssq, jnp.float32(1e-24)))
        views.append(v * inv_norm)

    def dot(a, b):  # cosine logit for one (t, u) pair, lane-dense
        return jnp.sum(a * b, axis=0, keepdims=True)                     # (1, tb)

    # Positive logits s[t, 0]: reused directly for loss_n (no exp->log round
    # trip); exp'd once for trans.
    pos_logit = [dot(views[t], views[0]) * inv_temp for t in range(1, T)]
    exp_pos = [jnp.exp(p) for p in pos_logit]

    # Distinct off-diagonal pairs among the transformed views (s is symmetric,
    # row 0 and the diagonal are never needed).
    exp_pair = {}
    for t in range(1, T):
        for u in range(t + 1, T):
            exp_pair[(t, u)] = jnp.exp(dot(views[t], views[u]) * inv_temp)

    loss_n = jnp.zeros((1, tb), jnp.float32)
    loss_a = jnp.zeros((1, tb), jnp.float32)
    for t in range(1, T):
        rest = None  # sum_{u >= 1, u != t} exp(s[t,u]/temp)  (= trans - pos)
        for u in range(1, T):
            if u == t:
                continue
            e = exp_pair[(t, u) if t < u else (u, t)]
            rest = e if rest is None else rest + e
        trans = rest + exp_pos[t - 1]
        log_trans = jnp.log(trans)
        loss_n = loss_n + (log_trans - pos_logit[t - 1])
        # -log(1 - pos/trans) == log(trans) - log(rest)   (no cancellation)
        loss_a = loss_a + (log_trans - jnp.log(rest))

    # Two unmasked lane-dense row stores (batch on the lane axis).
    out_ref[0, :] = (loss_n * coef)[0]
    out_ref[1, :] = (loss_a * coef)[0]


def _round_up(x: int, m: int) -> int:
    return ((x + m - 1) // m) * m


def _tiling(B: int):
    """Pick (batch_tile, padded_B).

    Small problems get one full-array block (block dims == array dims, so no
    (8,128) divisibility constraint).  Larger problems get the biggest
    lane-aligned tile that still leaves >= 2 grid steps (v7x megacore), with B
    padded up to a multiple of the tile (padded rows are zeros -> finite
    garbage that is sliced off).
    """
    if B <= 256:
        return B, B
    for tb in (1024, 512, 256, 128):
        if B >= 2 * tb:
            return tb, _round_up(B, tb)
    return 128, _round_up(B, 128)


def dcl_forward(z: jax.Array, temperature: float = 0.1):
    """Pallas implementation of DCL.forward.  z: (B, T, D) f32/bf16.

    Returns (loss_n, loss_a), each shape (B,), float32.
    """
    B, T, D = z.shape
    assert T >= 3, "DCL needs num_trans >= 3 (T == 2 makes scale = 1/|log(1)| undefined)"

    tb, Bp = _tiling(B)
    # Free row-major reshape: (B, T, D) -> (B, T*D) keeps the kernel input
    # block dense in both HBM and VMEM (no 32-of-128 lane padding).
    z2 = z.reshape(B, T * D)
    if Bp != B:
        z2 = jnp.pad(z2, ((0, Bp - B), (0, 0)))

    grid = (Bp // tb,)
    kernel = functools.partial(
        _dcl_kernel, num_trans=T, z_dim=D, temperature=float(temperature)
    )

    out = pl.pallas_call(
        kernel,
        out_shape=jax.ShapeDtypeStruct((2, Bp), jnp.float32),
        grid=grid,
        in_specs=[pl.BlockSpec((tb, T * D), lambda i: (i, 0))],
        out_specs=pl.BlockSpec((2, tb), lambda i: (0, i)),
        compiler_params=pltpu.CompilerParams(
            dimension_semantics=("parallel",),
            vmem_limit_bytes=32 * 1024 * 1024,
        ),
    )(z2)
    return out[0, :B], out[1, :B]


def _dcl_reference(z: jax.Array, temperature: float = 0.1):
    """Pure-JAX reference mirroring the PyTorch code, for validation."""
    z = z.astype(jnp.float32)
    z = z / jnp.maximum(jnp.linalg.norm(z, axis=-1, keepdims=True), 1e-12)
    B, T, D = z.shape
    sim = jnp.exp(jnp.matmul(z, jnp.swapaxes(z, 1, 2) / temperature))
    mask = 1.0 - jnp.eye(T)[None]
    trans = jnp.sum(sim * mask, axis=-1)[:, 1:]
    pos = jnp.exp(jnp.sum(z[:, 1:] * z[:, 0:1], axis=-1) / temperature)
    K = T - 1
    scale = 1.0 / abs(np.log(1.0 / K))
    loss_n = jnp.mean((jnp.log(trans) - jnp.log(pos)) * scale, axis=1)
    loss_a = jnp.mean(-jnp.log(1.0 - pos / trans) * scale, axis=1)
    return loss_n, loss_a


if __name__ == "__main__":
    key = jax.random.PRNGKey(0)

    # Small shape matching the module: batch=2, num_trans=8, z_dim=32.
    B, T, D = 2, 8, 32
    z = jax.random.normal(key, (B, T, D), dtype=jnp.float32)
    loss_n, loss_a = dcl_forward(z, temperature=0.1)
    jax.block_until_ready((loss_n, loss_a))
    ref_n, ref_a = _dcl_reference(z, 0.1)
    np.testing.assert_allclose(np.asarray(loss_n), np.asarray(ref_n), rtol=1e-4, atol=1e-4)
    np.testing.assert_allclose(np.asarray(loss_a), np.asarray(ref_a), rtol=1e-4, atol=1e-4)

    # Ragged / multi-block path (padding + parallel grid) sanity check.
    B2 = 600
    z_big = jax.random.normal(jax.random.PRNGKey(1), (B2, T, D), dtype=jnp.float32)
    ln2, la2 = dcl_forward(z_big, temperature=0.1)
    jax.block_until_ready((ln2, la2))
    rn2, ra2 = _dcl_reference(z_big, 0.1)
    np.testing.assert_allclose(np.asarray(ln2), np.asarray(rn2), rtol=1e-4, atol=1e-4)
    np.testing.assert_allclose(np.asarray(la2), np.asarray(ra2), rtol=1e-4, atol=1e-4)

    print("KERNEL_OK")
</pallas_src>

<mosaic_0001>
module attributes {stable_mosaic.version = 11 : i64} {
  func.func @_dcl_kernel(%arg0: i32, %arg1: memref<2x256xf32, #tpu.memory_space<vmem>>, %arg2: memref<2x2xf32, #tpu.memory_space<vmem>>) attributes {dimension_semantics = [#tpu.dimension_semantics<parallel>], iteration_bounds = array<i64: 1>, scalar_prefetch = 0 : i64, scratch_operands = 0 : i64, tpu.core_type = #tpu.core_type<tc>, window_params = [{transform_indices = @transform_0, window_bounds = array<i64: 2, 256>}, {transform_indices = @transform_1, window_bounds = array<i64: 2, 2>}]} {
    %c0 = arith.constant 0 : index
    %c0_0 = arith.constant 0 : index
    %0 = vector.load %arg1[%c0, %c0_0] : memref<2x256xf32, #tpu.memory_space<vmem>>, vector<2x256xf32>
    %1 = tpu.transpose %0, [1, 0] : vector<2x256xf32> -> vector<256x2xf32>
    %2 = vector.extract_strided_slice %1 {offsets = [0, 0], sizes = [32, 2], strides = [1, 1]} : vector<256x2xf32> to vector<32x2xf32>
    %3 = arith.mulf %2, %2 : vector<32x2xf32>
    %cst = arith.constant dense<0.000000e+00> : vector<2xf32>
    %4 = vector.multi_reduction <add>, %3, %cst [0] : vector<32x2xf32> to vector<2xf32>
    %5 = vector.shape_cast %4 : vector<2xf32> to vector<1x2xf32>
    %cst_1 = arith.constant 1.000000e-24 : f32
    %6 = vector.broadcast %cst_1 : f32 to vector<1x2xf32>
    %7 = arith.maximumf %5, %6 : vector<1x2xf32>
    %8 = math.rsqrt %7 : vector<1x2xf32>
    %9 = vector.broadcast %8 : vector<1x2xf32> to vector<32x2xf32>
    %10 = arith.mulf %2, %9 : vector<32x2xf32>
    %11 = vector.extract_strided_slice %1 {offsets = [32, 0], sizes = [32, 2], strides = [1, 1]} : vector<256x2xf32> to vector<32x2xf32>
    %12 = arith.mulf %11, %11 : vector<32x2xf32>
    %cst_2 = arith.constant dense<0.000000e+00> : vector<2xf32>
    %13 = vector.multi_reduction <add>, %12, %cst_2 [0] : vector<32x2xf32> to vector<2xf32>
    %14 = vector.shape_cast %13 : vector<2xf32> to vector<1x2xf32>
    %cst_3 = arith.constant 1.000000e-24 : f32
    %15 = vector.broadcast %cst_3 : f32 to vector<1x2xf32>
    %16 = arith.maximumf %14, %15 : vector<1x2xf32>
    %17 = math.rsqrt %16 : vector<1x2xf32>
    %18 = vector.broadcast %17 : vector<1x2xf32> to vector<32x2xf32>
    %19 = arith.mulf %11, %18 : vector<32x2xf32>
    %20 = vector.extract_strided_slice %1 {offsets = [64, 0], sizes = [32, 2], strides = [1, 1]} : vector<256x2xf32> to vector<32x2xf32>
    %21 = arith.mulf %20, %20 : vector<32x2xf32>
    %cst_4 = arith.constant dense<0.000000e+00> : vector<2xf32>
    %22 = vector.multi_reduction <add>, %21, %cst_4 [0] : vector<32x2xf32> to vector<2xf32>
    %23 = vector.shape_cast %22 : vector<2xf32> to vector<1x2xf32>
    %cst_5 = arith.constant 1.000000e-24 : f32
    %24 = vector.broadcast %cst_5 : f32 to vector<1x2xf32>
    %25 = arith.maximumf %23, %24 : vector<1x2xf32>
    %26 = math.rsqrt %25 : vector<1x2xf32>
    %27 = vector.broadcast %26 : vector<1x2xf32> to vector<32x2xf32>
    %28 = arith.mulf %20, %27 : vector<32x2xf32>
    %29 = vector.extract_strided_slice %1 {offsets = [96, 0], sizes = [32, 2], strides = [1, 1]} : vector<256x2xf32> to vector<32x2xf32>
    %30 = arith.mulf %29, %29 : vector<32x2xf32>
    %cst_6 = arith.constant dense<0.000000e+00> : vector<2xf32>
    %31 = vector.multi_reduction <add>, %30, %cst_6 [0] : vector<32x2xf32> to vector<2xf32>
    %32 = vector.shape_cast %31 : vector<2xf32> to vector<1x2xf32>
    %cst_7 = arith.constant 1.000000e-24 : f32
    %33 = vector.broadcast %cst_7 : f32 to vector<1x2xf32>
    %34 = arith.maximumf %32, %33 : vector<1x2xf32>
    %35 = math.rsqrt %34 : vector<1x2xf32>
    %36 = vector.broadcast %35 : vector<1x2xf32> to vector<32x2xf32>
    %37 = arith.mulf %29, %36 : vector<32x2xf32>
    %38 = vector.extract_strided_slice %1 {offsets = [128, 0], sizes = [32, 2], strides = [1, 1]} : vector<256x2xf32> to vector<32x2xf32>
    %39 = arith.mulf %38, %38 : vector<32x2xf32>
    %cst_8 = arith.constant dense<0.000000e+00> : vector<2xf32>
    %40 = vector.multi_reduction <add>, %39, %cst_8 [0] : vector<32x2xf32> to vector<2xf32>
    %41 = vector.shape_cast %40 : vector<2xf32> to vector<1x2xf32>
    %cst_9 = arith.constant 1.000000e-24 : f32
    %42 = vector.broadcast %cst_9 : f32 to vector<1x2xf32>
    %43 = arith.maximumf %41, %42 : vector<1x2xf32>
    %44 = math.rsqrt %43 : vector<1x2xf32>
    %45 = vector.broadcast %44 : vector<1x2xf32> to vector<32x2xf32>
    %46 = arith.mulf %38, %45 : vector<32x2xf32>
    %47 = vector.extract_strided_slice %1 {offsets = [160, 0], sizes = [32, 2], strides = [1, 1]} : vector<256x2xf32> to vector<32x2xf32>
    %48 = arith.mulf %47, %47 : vector<32x2xf32>
    %cst_10 = arith.constant dense<0.000000e+00> : vector<2xf32>
    %49 = vector.multi_reduction <add>, %48, %cst_10 [0] : vector<32x2xf32> to vector<2xf32>
    %50 = vector.shape_cast %49 : vector<2xf32> to vector<1x2xf32>
    %cst_11 = arith.constant 1.000000e-24 : f32
    %51 = vector.broadcast %cst_11 : f32 to vector<1x2xf32>
    %52 = arith.maximumf %50, %51 : vector<1x2xf32>
    %53 = math.rsqrt %52 : vector<1x2xf32>
    %54 = vector.broadcast %53 : vector<1x2xf32> to vector<32x2xf32>
    %55 = arith.mulf %47, %54 : vector<32x2xf32>
    %56 = vector.extract_strided_slice %1 {offsets = [192, 0], sizes = [32, 2], strides = [1, 1]} : vector<256x2xf32> to vector<32x2xf32>
    %57 = arith.mulf %56, %56 : vector<32x2xf32>
    %cst_12 = arith.constant dense<0.000000e+00> : vector<2xf32>
    %58 = vector.multi_reduction <add>, %57, %cst_12 [0] : vector<32x2xf32> to vector<2xf32>
    %59 = vector.shape_cast %58 : vector<2xf32> to vector<1x2xf32>
    %cst_13 = arith.constant 1.000000e-24 : f32
    %60 = vector.broadcast %cst_13 : f32 to vector<1x2xf32>
    %61 = arith.maximumf %59, %60 : vector<1x2xf32>
    %62 = math.rsqrt %61 : vector<1x2xf32>
    %63 = vector.broadcast %62 : vector<1x2xf32> to vector<32x2xf32>
    %64 = arith.mulf %56, %63 : vector<32x2xf32>
    %65 = vector.extract_strided_slice %1 {offsets = [224, 0], sizes = [32, 2], strides = [1, 1]} : vector<256x2xf32> to vector<32x2xf32>
    %66 = arith.mulf %65, %65 : vector<32x2xf32>
    %cst_14 = arith.constant dense<0.000000e+00> : vector<2xf32>
    %67 = vector.multi_reduction <add>, %66, %cst_14 [0] : vector<32x2xf32> to vector<2xf32>
    %68 = vector.shape_cast %67 : vector<2xf32> to vector<1x2xf32>
    %cst_15 = arith.constant 1.000000e-24 : f32
    %69 = vector.broadcast %cst_15 : f32 to vector<1x2xf32>
    %70 = arith.maximumf %68, %69 : vector<1x2xf32>
    %71 = math.rsqrt %70 : vector<1x2xf32>
    %72 = vector.broadcast %71 : vector<1x2xf32> to vector<32x2xf32>
    %73 = arith.mulf %65, %72 : vector<32x2xf32>
    %74 = arith.mulf %19, %10 : vector<32x2xf32>
    %cst_16 = arith.constant dense<0.000000e+00> : vector<2xf32>
    %75 = vector.multi_reduction <add>, %74, %cst_16 [0] : vector<32x2xf32> to vector<2xf32>
    %76 = vector.shape_cast %75 : vector<2xf32> to vector<1x2xf32>
    %cst_17 = arith.constant 1.000000e+01 : f32
    %77 = vector.broadcast %cst_17 : f32 to vector<1x2xf32>
    %78 = arith.mulf %76, %77 : vector<1x2xf32>
    %79 = arith.mulf %28, %10 : vector<32x2xf32>
    %cst_18 = arith.constant dense<0.000000e+00> : vector<2xf32>
    %80 = vector.multi_reduction <add>, %79, %cst_18 [0] : vector<32x2xf32> to vector<2xf32>
    %81 = vector.shape_cast %80 : vector<2xf32> to vector<1x2xf32>
    %cst_19 = arith.constant 1.000000e+01 : f32
    %82 = vector.broadcast %cst_19 : f32 to vector<1x2xf32>
    %83 = arith.mulf %81, %82 : vector<1x2xf32>
    %84 = arith.mulf %37, %10 : vector<32x2xf32>
    %cst_20 = arith.constant dense<0.000000e+00> : vector<2xf32>
    %85 = vector.multi_reduction <add>, %84, %cst_20 [0] : vector<32x2xf32> to vector<2xf32>
    %86 = vector.shape_cast %85 : vector<2xf32> to vector<1x2xf32>
    %cst_21 = arith.constant 1.000000e+01 : f32
    %87 = vector.broadcast %cst_21 : f32 to vector<1x2xf32>
    %88 = arith.mulf %86, %87 : vector<1x2xf32>
    %89 = arith.mulf %46, %10 : vector<32x2xf32>
    %cst_22 = arith.constant dense<0.000000e+00> : vector<2xf32>
    %90 = vector.multi_reduction <add>, %89, %cst_22 [0] : vector<32x2xf32> to vector<2xf32>
    %91 = vector.shape_cast %90 : vector<2xf32> to vector<1x2xf32>
    %cst_23 = arith.constant 1.000000e+01 : f32
    %92 = vector.broadcast %cst_23 : f32 to vector<1x2xf32>
    %93 = arith.mulf %91, %92 : vector<1x2xf32>
    %94 = arith.mulf %55, %10 : vector<32x2xf32>
    %cst_24 = arith.constant dense<0.000000e+00> : vector<2xf32>
    %95 = vector.multi_reduction <add>, %94, %cst_24 [0] : vector<32x2xf32> to vector<2xf32>
    %96 = vector.shape_cast %95 : vector<2xf32> to vector<1x2xf32>
    %cst_25 = arith.constant 1.000000e+01 : f32
    %97 = vector.broadcast %cst_25 : f32 to vector<1x2xf32>
    %98 = arith.mulf %96, %97 : vector<1x2xf32>
    %99 = arith.mulf %64, %10 : vector<32x2xf32>
    %cst_26 = arith.constant dense<0.000000e+00> : vector<2xf32>
    %100 = vector.multi_reduction <add>, %99, %cst_26 [0] : vector<32x2xf32> to vector<2xf32>
    %101 = vector.shape_cast %100 : vector<2xf32> to vector<1x2xf32>
    %cst_27 = arith.constant 1.000000e+01 : f32
    %102 = vector.broadcast %cst_27 : f32 to vector<1x2xf32>
    %103 = arith.mulf %101, %102 : vector<1x2xf32>
    %104 = arith.mulf %73, %10 : vector<32x2xf32>
    %cst_28 = arith.constant dense<0.000000e+00> : vector<2xf32>
    %105 = vector.multi_reduction <add>, %104, %cst_28 [0] : vector<32x2xf32> to vector<2xf32>
    %106 = vector.shape_cast %105 : vector<2xf32> to vector<1x2xf32>
    %cst_29 = arith.constant 1.000000e+01 : f32
    %107 = vector.broadcast %cst_29 : f32 to vector<1x2xf32>
    %108 = arith.mulf %106, %107 : vector<1x2xf32>
    %109 = math.exp %78 : vector<1x2xf32>
    %110 = math.exp %83 : vector<1x2xf32>
    %111 = math.exp %88 : vector<1x2xf32>
    %112 = math.exp %93 : vector<1x2xf32>
    %113 = math.exp %98 : vector<1x2xf32>
    %114 = math.exp %103 : vector<1x2xf32>
    %115 = math.exp %108 : vector<1x2xf32>
    %116 = arith.mulf %19, %28 : vector<32x2xf32>
    %cst_30 = arith.constant dense<0.000000e+00> : vector<2xf32>
    %117 = vector.multi_reduction <add>, %116, %cst_30 [0] : vector<32x2xf32> to vector<2xf32>
    %118 = vector.shape_cast %117 : vector<2xf32> to vector<1x2xf32>
    %cst_31 = arith.constant 1.000000e+01 : f32
    %119 = vector.broadcast %cst_31 : f32 to vector<1x2xf32>
    %120 = arith.mulf %118, %119 : vector<1x2xf32>
    %121 = math.exp %120 : vector<1x2xf32>
    %122 = arith.mulf %19, %37 : vector<32x2xf32>
    %cst_32 = arith.constant dense<0.000000e+00> : vector<2xf32>
    %123 = vector.multi_reduction <add>, %122, %cst_32 [0] : vector<32x2xf32> to vector<2xf32>
    %124 = vector.shape_cast %123 : vector<2xf32> to vector<1x2xf32>
    %cst_33 = arith.constant 1.000000e+01 : f32
    %125 = vector.broadcast %cst_33 : f32 to vector<1x2xf32>
    %126 = arith.mulf %124, %125 : vector<1x2xf32>
    %127 = math.exp %126 : vector<1x2xf32>
    %128 = arith.mulf %19, %46 : vector<32x2xf32>
    %cst_34 = arith.constant dense<0.000000e+00> : vector<2xf32>
    %129 = vector.multi_reduction <add>, %128, %cst_34 [0] : vector<32x2xf32> to vector<2xf32>
    %130 = vector.shape_cast %129 : vector<2xf32> to vector<1x2xf32>
    %cst_35 = arith.constant 1.000000e+01 : f32
    %131 = vector.broadcast %cst_35 : f32 to vector<1x2xf32>
    %132 = arith.mulf %130, %131 : vector<1x2xf32>
    %133 = math.exp %132 : vector<1x2xf32>
    %134 = arith.mulf %19, %55 : vector<32x2xf32>
    %cst_36 = arith.constant dense<0.000000e+00> : vector<2xf32>
    %135 = vector.multi_reduction <add>, %134, %cst_36 [0] : vector<32x2xf32> to vector<2xf32>
    %136 = vector.shape_cast %135 : vector<2xf32> to vector<1x2xf32>
    %cst_37 = arith.constant 1.000000e+01 : f32
    %137 = vector.broadcast %cst_37 : f32 to vector<1x2xf32>
    %138 = arith.mulf %136, %137 : vector<1x2xf32>
    %139 = math.exp %138 : vector<1x2xf32>
    %140 = arith.mulf %19, %64 : vector<32x2xf32>
    %cst_38 = arith.constant dense<0.000000e+00> : vector<2xf32>
    %141 = vector.multi_reduction <add>, %140, %cst_38 [0] : vector<32x2xf32> to vector<2xf32>
    %142 = vector.shape_cast %141 : vector<2xf32> to vector<1x2xf32>
    %cst_39 = arith.constant 1.000000e+01 : f32
    %143 = vector.broadcast %cst_39 : f32 to vector<1x2xf32>
    %144 = arith.mulf %142, %143 : vector<1x2xf32>
    %145 = math.exp %144 : vector<1x2xf32>
    %146 = arith.mulf %19, %73 : vector<32x2xf32>
    %cst_40 = arith.constant dense<0.000000e+00> : vector<2xf32>
    %147 = vector.multi_reduction <add>, %146, %cst_40 [0] : vector<32x2xf32> to vector<2xf32>
    %148 = vector.shape_cast %147 : vector<2xf32> to vector<1x2xf32>
    %cst_41 = arith.constant 1.000000e+01 : f32
    %149 = vector.broadcast %cst_41 : f32 to vector<1x2xf32>
    %150 = arith.mulf %148, %149 : vector<1x2xf32>
    %151 = math.exp %150 : vector<1x2xf32>
    %152 = arith.mulf %28, %37 : vector<32x2xf32>
    %cst_42 = arith.constant dense<0.000000e+00> : vector<2xf32>
    %153 = vector.multi_reduction <add>, %152, %cst_42 [0] : vector<32x2xf32> to vector<2xf32>
    %154 = vector.shape_cast %153 : vector<2xf32> to vector<1x2xf32>
    %cst_43 = arith.constant 1.000000e+01 : f32
    %155 = vector.broadcast %cst_43 : f32 to vector<1x2xf32>
    %156 = arith.mulf %154, %155 : vector<1x2xf32>
    %157 = math.exp %156 : vector<1x2xf32>
    %158 = arith.mulf %28, %46 : vector<32x2xf32>
    %cst_44 = arith.constant dense<0.000000e+00> : vector<2xf32>
    %159 = vector.multi_reduction <add>, %158, %cst_44 [0] : vector<32x2xf32> to vector<2xf32>
    %160 = vector.shape_cast %159 : vector<2xf32> to vector<1x2xf32>
    %cst_45 = arith.constant 1.000000e+01 : f32
    %161 = vector.broadcast %cst_45 : f32 to vector<1x2xf32>
    %162 = arith.mulf %160, %161 : vector<1x2xf32>
    %163 = math.exp %162 : vector<1x2xf32>
    %164 = arith.mulf %28, %55 : vector<32x2xf32>
    %cst_46 = arith.constant dense<0.000000e+00> : vector<2xf32>
    %165 = vector.multi_reduction <add>, %164, %cst_46 [0] : vector<32x2xf32> to vector<2xf32>
    %166 = vector.shape_cast %165 : vector<2xf32> to vector<1x2xf32>
    %cst_47 = arith.constant 1.000000e+01 : f32
    %167 = vector.broadcast %cst_47 : f32 to vector<1x2xf32>
    %168 = arith.mulf %166, %167 : vector<1x2xf32>
    %169 = math.exp %168 : vector<1x2xf32>
    %170 = arith.mulf %28, %64 : vector<32x2xf32>
    %cst_48 = arith.constant dense<0.000000e+00> : vector<2xf32>
    %171 = vector.multi_reduction <add>, %170, %cst_48 [0] : vector<32x2xf32> to vector<2xf32>
    %172 = vector.shape_cast %171 : vector<2xf32> to vector<1x2xf32>
    %cst_49 = arith.constant 1.000000e+01 : f32
    %173 = vector.broadcast %cst_49 : f32 to vector<1x2xf32>
    %174 = arith.mulf %172, %173 : vector<1x2xf32>
    %175 = math.exp %174 : vector<1x2xf32>
    %176 = arith.mulf %28, %73 : vector<32x2xf32>
    %cst_50 = arith.constant dense<0.000000e+00> : vector<2xf32>
    %177 = vector.multi_reduction <add>, %176, %cst_50 [0] : vector<32x2xf32> to vector<2xf32>
    %178 = vector.shape_cast %177 : vector<2xf32> to vector<1x2xf32>
    %cst_51 = arith.constant 1.000000e+01 : f32
    %179 = vector.broadcast %cst_51 : f32 to vector<1x2xf32>
    %180 = arith.mulf %178, %179 : vector<1x2xf32>
    %181 = math.exp %180 : vector<1x2xf32>
    %182 = arith.mulf %37, %46 : vector<32x2xf32>
    %cst_52 = arith.constant dense<0.000000e+00> : vector<2xf32>
    %183 = vector.multi_reduction <add>, %182, %cst_52 [0] : vector<32x2xf32> to vector<2xf32>
    %184 = vector.shape_cast %183 : vector<2xf32> to vector<1x2xf32>
    %cst_53 = arith.constant 1.000000e+01 : f32
    %185 = vector.broadcast %cst_53 : f32 to vector<1x2xf32>
    %186 = arith.mulf %184, %185 : vector<1x2xf32>
    %187 = math.exp %186 : vector<1x2xf32>
    %188 = arith.mulf %37, %55 : vector<32x2xf32>
    %cst_54 = arith.constant dense<0.000000e+00> : vector<2xf32>
    %189 = vector.multi_reduction <add>, %188, %cst_54 [0] : vector<32x2xf32> to vector<2xf32>
    %190 = vector.shape_cast %189 : vector<2xf32> to vector<1x2xf32>
    %cst_55 = arith.constant 1.000000e+01 : f32
    %191 = vector.broadcast %cst_55 : f32 to vector<1x2xf32>
    %192 = arith.mulf %190, %191 : vector<1x2xf32>
    %193 = math.exp %192 : vector<1x2xf32>
    %194 = arith.mulf %37, %64 : vector<32x2xf32>
    %cst_56 = arith.constant dense<0.000000e+00> : vector<2xf32>
    %195 = vector.multi_reduction <add>, %194, %cst_56 [0] : vector<32x2xf32> to vector<2xf32>
    %196 = vector.shape_cast %195 : vector<2xf32> to vector<1x2xf32>
    %cst_57 = arith.constant 1.000000e+01 : f32
    %197 = vector.broadcast %cst_57 : f32 to vector<1x2xf32>
    %198 = arith.mulf %196, %197 : vector<1x2xf32>
    %199 = math.exp %198 : vector<1x2xf32>
    %200 = arith.mulf %37, %73 : vector<32x2xf32>
    %cst_58 = arith.constant dense<0.000000e+00> : vector<2xf32>
    %201 = vector.multi_reduction <add>, %200, %cst_58 [0] : vector<32x2xf32> to vector<2xf32>
    %202 = vector.shape_cast %201 : vector<2xf32> to vector<1x2xf32>
    %cst_59 = arith.constant 1.000000e+01 : f32
    %203 = vector.broadcast %cst_59 : f32 to vector<1x2xf32>
    %204 = arith.mulf %202, %203 : vector<1x2xf32>
    %205 = math.exp %204 : vector<1x2xf32>
    %206 = arith.mulf %46, %55 : vector<32x2xf32>
    %cst_60 = arith.constant dense<0.000000e+00> : vector<2xf32>
    %207 = vector.multi_reduction <add>, %206, %cst_60 [0] : vector<32x2xf32> to vector<2xf32>
    %208 = vector.shape_cast %207 : vector<2xf32> to vector<1x2xf32>
    %cst_61 = arith.constant 1.000000e+01 : f32
    %209 = vector.broadcast %cst_61 : f32 to vector<1x2xf32>
    %210 = arith.mulf %208, %209 : vector<1x2xf32>
    %211 = math.exp %210 : vector<1x2xf32>
    %212 = arith.mulf %46, %64 : vector<32x2xf32>
    %cst_62 = arith.constant dense<0.000000e+00> : vector<2xf32>
    %213 = vector.multi_reduction <add>, %212, %cst_62 [0] : vector<32x2xf32> to vector<2xf32>
    %214 = vector.shape_cast %213 : vector<2xf32> to vector<1x2xf32>
    %cst_63 = arith.constant 1.000000e+01 : f32
    %215 = vector.broadcast %cst_63 : f32 to vector<1x2xf32>
    %216 = arith.mulf %214, %215 : vector<1x2xf32>
    %217 = math.exp %216 : vector<1x2xf32>
    %218 = arith.mulf %46, %73 : vector<32x2xf32>
    %cst_64 = arith.constant dense<0.000000e+00> : vector<2xf32>
    %219 = vector.multi_reduction <add>, %218, %cst_64 [0] : vector<32x2xf32> to vector<2xf32>
    %220 = vector.shape_cast %219 : vector<2xf32> to vector<1x2xf32>
    %cst_65 = arith.constant 1.000000e+01 : f32
    %221 = vector.broadcast %cst_65 : f32 to vector<1x2xf32>
    %222 = arith.mulf %220, %221 : vector<1x2xf32>
    %223 = math.exp %222 : vector<1x2xf32>
    %224 = arith.mulf %55, %64 : vector<32x2xf32>
    %cst_66 = arith.constant dense<0.000000e+00> : vector<2xf32>
    %225 = vector.multi_reduction <add>, %224, %cst_66 [0] : vector<32x2xf32> to vector<2xf32>
    %226 = vector.shape_cast %225 : vector<2xf32> to vector<1x2xf32>
    %cst_67 = arith.constant 1.000000e+01 : f32
    %227 = vector.broadcast %cst_67 : f32 to vector<1x2xf32>
    %228 = arith.mulf %226, %227 : vector<1x2xf32>
    %229 = math.exp %228 : vector<1x2xf32>
    %230 = arith.mulf %55, %73 : vector<32x2xf32>
    %cst_68 = arith.constant dense<0.000000e+00> : vector<2xf32>
    %231 = vector.multi_reduction <add>, %230, %cst_68 [0] : vector<32x2xf32> to vector<2xf32>
    %232 = vector.shape_cast %231 : vector<2xf32> to vector<1x2xf32>
    %cst_69 = arith.constant 1.000000e+01 : f32
    %233 = vector.broadcast %cst_69 : f32 to vector<1x2xf32>
    %234 = arith.mulf %232, %233 : vector<1x2xf32>
    %235 = math.exp %234 : vector<1x2xf32>
    %236 = arith.mulf %64, %73 : vector<32x2xf32>
    %cst_70 = arith.constant dense<0.000000e+00> : vector<2xf32>
    %237 = vector.multi_reduction <add>, %236, %cst_70 [0] : vector<32x2xf32> to vector<2xf32>
    %238 = vector.shape_cast %237 : vector<2xf32> to vector<1x2xf32>
    %cst_71 = arith.constant 1.000000e+01 : f32
    %239 = vector.broadcast %cst_71 : f32 to vector<1x2xf32>
    %240 = arith.mulf %238, %239 : vector<1x2xf32>
    %241 = math.exp %240 : vector<1x2xf32>
    %cst_72 = arith.constant 0.000000e+00 : f32
    %242 = vector.broadcast %cst_72 : f32 to vector<1x2xf32>
    %cst_73 = arith.constant 0.000000e+00 : f32
    %243 = vector.broadcast %cst_73 : f32 to vector<1x2xf32>
    %244 = arith.addf %121, %127 : vector<1x2xf32>
    %245 = arith.addf %244, %133 : vector<1x2xf32>
    %246 = arith.addf %245, %139 : vector<1x2xf32>
    %247 = arith.addf %246, %145 : vector<1x2xf32>
    %248 = arith.addf %247, %151 : vector<1x2xf32>
    %249 = arith.addf %248, %109 : vector<1x2xf32>
    %250 = math.log %249 : vector<1x2xf32>
    %251 = arith.subf %250, %78 : vector<1x2xf32>
    %252 = arith.addf %242, %251 : vector<1x2xf32>
    %253 = math.log %248 : vector<1x2xf32>
    %254 = arith.subf %250, %253 : vector<1x2xf32>
    %255 = arith.addf %243, %254 : vector<1x2xf32>
    %256 = arith.addf %121, %157 : vector<1x2xf32>
    %257 = arith.addf %256, %163 : vector<1x2xf32>
    %258 = arith.addf %257, %169 : vector<1x2xf32>
    %259 = arith.addf %258, %175 : vector<1x2xf32>
    %260 = arith.addf %259, %181 : vector<1x2xf32>
    %261 = arith.addf %260, %110 : vector<1x2xf32>
    %262 = math.log %261 : vector<1x2xf32>
    %263 = arith.subf %262, %83 : vector<1x2xf32>
    %264 = arith.addf %252, %263 : vector<1x2xf32>
    %265 = math.log %260 : vector<1x2xf32>
    %266 = arith.subf %262, %265 : vector<1x2xf32>
    %267 = arith.addf %255, %266 : vector<1x2xf32>
    %268 = arith.addf %127, %157 : vector<1x2xf32>
    %269 = arith.addf %268, %187 : vector<1x2xf32>
    %270 = arith.addf %269, %193 : vector<1x2xf32>
    %271 = arith.addf %270, %199 : vector<1x2xf32>
    %272 = arith.addf %271, %205 : vector<1x2xf32>
    %273 = arith.addf %272, %111 : vector<1x2xf32>
    %274 = math.log %273 : vector<1x2xf32>
    %275 = arith.subf %274, %88 : vector<1x2xf32>
    %276 = arith.addf %264, %275 : vector<1x2xf32>
    %277 = math.log %272 : vector<1x2xf32>
    %278 = arith.subf %274, %277 : vector<1x2xf32>
    %279 = arith.addf %267, %278 : vector<1x2xf32>
    %280 = arith.addf %133, %163 : vector<1x2xf32>
    %281 = arith.addf %280, %187 : vector<1x2xf32>
    %282 = arith.addf %281, %211 : vector<1x2xf32>
    %283 = arith.addf %282, %217 : vector<1x2xf32>
    %284 = arith.addf %283, %223 : vector<1x2xf32>
    %285 = arith.addf %284, %112 : vector<1x2xf32>
    %286 = math.log %285 : vector<1x2xf32>
    %287 = arith.subf %286, %93 : vector<1x2xf32>
    %288 = arith.addf %276, %287 : vector<1x2xf32>
    %289 = math.log %284 : vector<1x2xf32>
    %290 = arith.subf %286, %289 : vector<1x2xf32>
    %291 = arith.addf %279, %290 : vector<1x2xf32>
    %292 = arith.addf %139, %169 : vector<1x2xf32>
    %293 = arith.addf %292, %193 : vector<1x2xf32>
    %294 = arith.addf %293, %211 : vector<1x2xf32>
    %295 = arith.addf %294, %229 : vector<1x2xf32>
    %296 = arith.addf %295, %235 : vector<1x2xf32>
    %297 = arith.addf %296, %113 : vector<1x2xf32>
    %298 = math.log %297 : vector<1x2xf32>
    %299 = arith.subf %298, %98 : vector<1x2xf32>
    %300 = arith.addf %288, %299 : vector<1x2xf32>
    %301 = math.log %296 : vector<1x2xf32>
    %302 = arith.subf %298, %301 : vector<1x2xf32>
    %303 = arith.addf %291, %302 : vector<1x2xf32>
    %304 = arith.addf %145, %175 : vector<1x2xf32>
    %305 = arith.addf %304, %199 : vector<1x2xf32>
    %306 = arith.addf %305, %217 : vector<1x2xf32>
    %307 = arith.addf %306, %229 : vector<1x2xf32>
    %308 = arith.addf %307, %241 : vector<1x2xf32>
    %309 = arith.addf %308, %114 : vector<1x2xf32>
    %310 = math.log %309 : vector<1x2xf32>
    %311 = arith.subf %310, %103 : vector<1x2xf32>
    %312 = arith.addf %300, %311 : vector<1x2xf32>
    %313 = math.log %308 : vector<1x2xf32>
    %314 = arith.subf %310, %313 : vector<1x2xf32>
    %315 = arith.addf %303, %314 : vector<1x2xf32>
    %316 = arith.addf %151, %181 : vector<1x2xf32>
    %317 = arith.addf %316, %205 : vector<1x2xf32>
    %318 = arith.addf %317, %223 : vector<1x2xf32>
    %319 = arith.addf %318, %235 : vector<1x2xf32>
    %320 = arith.addf %319, %241 : vector<1x2xf32>
    %321 = arith.addf %320, %115 : vector<1x2xf32>
    %322 = math.log %321 : vector<1x2xf32>
    %323 = arith.subf %322, %108 : vector<1x2xf32>
    %324 = arith.addf %312, %323 : vector<1x2xf32>
    %325 = math.log %320 : vector<1x2xf32>
    %326 = arith.subf %322, %325 : vector<1x2xf32>
    %327 = arith.addf %315, %326 : vector<1x2xf32>
    %cst_74 = arith.constant 0.07341405 : f32
    %328 = vector.broadcast %cst_74 : f32 to vector<1x2xf32>
    %329 = arith.mulf %324, %328 : vector<1x2xf32>
    %330 = vector.shape_cast %329 : vector<1x2xf32> to vector<2xf32>
    %c0_75 = arith.constant 0 : index
    %c0_76 = arith.constant 0 : index
    %331 = vector.load %arg2[%c0_75, %c0_76] : memref<2x2xf32, #tpu.memory_space<vmem>>, vector<1x2xf32>
    %332 = vector.shape_cast %331 : vector<1x2xf32> to vector<2xf32>
    %333 = vector.shape_cast %330 : vector<2xf32> to vector<1x2xf32>
    tpu.vector_store %arg2[%c0_75, %c0_76], %333 {strides = array<i32>} : memref<2x2xf32, #tpu.memory_space<vmem>>, vector<1x2xf32>,
    %cst_77 = arith.constant 0.07341405 : f32
    %334 = vector.broadcast %cst_77 : f32 to vector<1x2xf32>
    %335 = arith.mulf %327, %334 : vector<1x2xf32>
    %336 = vector.shape_cast %335 : vector<1x2xf32> to vector<2xf32>
    %c1 = arith.constant 1 : index
    %c0_78 = arith.constant 0 : index
    %337 = vector.load %arg2[%c1, %c0_78] : memref<2x2xf32, #tpu.memory_space<vmem>>, vector<1x2xf32>
    %338 = vector.shape_cast %337 : vector<1x2xf32> to vector<2xf32>
    %339 = vector.shape_cast %336 : vector<2xf32> to vector<1x2xf32>
    tpu.vector_store %arg2[%c1, %c0_78], %339 {strides = array<i32>} : memref<2x2xf32, #tpu.memory_space<vmem>>, vector<1x2xf32>,
    return
  }
  func.func @transform_0(%arg0: i32) -> (i32, i32) {
    %c0_i32 = arith.constant 0 : i32
    %c0_i32_0 = arith.constant 0 : i32
    return %arg0, %c0_i32 : i32, i32
  }
  func.func @transform_1(%arg0: i32) -> (i32, i32) {
    %c0_i32 = arith.constant 0 : i32
    %c0_i32_0 = arith.constant 0 : i32
    return %c0_i32, %arg0 : i32, i32
  }
}

</mosaic_0001>

<llo_original>
// kernel: tpu_custom_call.1
$region0: #{tpu_custom_call.1}
  #allocation0 [shape = 'u32[]', space=smem, size = 0x4, offset = 0x4, fixed_abs, tag = 'smem constant byte address 0x4 - core index']
  #allocation1 [shape = 'u32[72,128]{1,0:T(1,128)}', space=vmem, size = 0x9000, scoped, tag = 'internal scratch']
  %s0 = inlined_call_operand.hbm [shape: f32[2,256], index: 0, kind: input, shape index: {}]
  %s1 = inlined_call_operand.hbm [shape: f32[2,2], index: 1, kind: output, shape index: {}]
  %s2 = sld [smem:[#allocation0]]
  $region18: #{tpu_custom_call.1} parent=0
    _
  %s4 = ssub.s32 1, %s2
  %s5 = scalar_select 0, %s4, %s2
  $region1: #{tpu_custom_call.1} parent=0
    #allocation2 [shape = 'u8[2048]{0}', space=vmem, size = 0x800, scoped, tag = 'input window, operand 0, single buffered']
    #allocation3 [shape = 's32[1]{0}', space=sflag, size = 0x4, scoped, tag = 'scoped memory for tpu_custom_call.1']
    #allocation4 [shape = 's32[1]{0}', space=sflag, size = 0x4, scoped, tag = 'scoped memory for tpu_custom_call.1']
    #allocation5 [shape = 'u8[1024]{0}', space=vmem, size = 0x400, scoped, tag = 'output window, operand 0, single buffered']
    %6 = vsyncpa [#allocation3], 0
    %7 = vsyncpa [#allocation4], 0
    // Predicated region
    $region2: #{tpu_custom_call.1} parent=1 // pred_check
      _
    $region3: #{tpu_custom_call.1} parent=1 // pred_check_branch
      %9 = sbr.rel (0) target = $region5
    $region4: #{tpu_custom_call.1} parent=1 // pred_region
      %11 = vsyncadd [#allocation3], 0
      %s13 = sshll.u32 %s0, 4
      %s14 = int_to_ptr.hbm [resolvable:$true] %s13
      %s15 = sshll.u32 [#allocation2], 4
      %s16 = int_to_ptr.vmem [resolvable:$true] %s15
      %18 = dma.hbm_to_vmem [thread:$0]  %s14, 64, %s16, [#allocation3]
    $region5: #{tpu_custom_call.1} parent=1 // pred_fallthru
      _
    // Predicated region
    $region6: #{tpu_custom_call.1} parent=1 // pred_check
      _
    $region7: #{tpu_custom_call.1} parent=1 // pred_check_branch
      %20 = sbr.rel (0) target = $region9
    $region8: #{tpu_custom_call.1} parent=1 // pred_region
      %22 = dma.done [#allocation3], 64
    $region9: #{tpu_custom_call.1} parent=1 // pred_fallthru
      _
    %v23 = vld [vmem:[#allocation2] sm:$0xf]
    %25 = vst [vmem:[#allocation1] ss:$4 sm:$0xff] %v23
    %v26 = vld.sshfl [vmem:[#allocation1] sm:$0xff pattern:$0x73625140]
    %v27 = vld.sshfl [vmem:[#allocation1 + $0x8] sm:$0xff pattern:$0x73625140]
    %30 = vxpose.xlu0.b32.start [1/16] %v26, 128
    %31 = vxpose.xlu0.b32.cont [2/16] 0.0, 128
    %32 = vxpose.xlu0.b32.cont [3/16] 0.0, 128
    %33 = vxpose.xlu0.b32.cont [4/16] 0.0, 128
    %34 = vxpose.xlu0.b32.cont [5/16] 0.0, 128
    %35 = vxpose.xlu0.b32.cont [6/16] 0.0, 128
    %36 = vxpose.xlu0.b32.cont [7/16] 0.0, 128
    %37 = vxpose.xlu0.b32.cont [8/16] 0.0, 128
    %38 = vxpose.xlu0.b32.cont [9/16] 0.0, 128
    %39 = vxpose.xlu0.b32.cont [10/16] 0.0, 128
    %40 = vxpose.xlu0.b32.cont [11/16] 0.0, 128
    %41 = vxpose.xlu0.b32.cont [12/16] 0.0, 128
    %42 = vxpose.xlu0.b32.cont [13/16] 0.0, 128
    %43 = vxpose.xlu0.b32.cont [14/16] 0.0, 128
    %44 = vxpose.xlu0.b32.cont [15/16] 0.0, 128
    %45 = vxpose.xlu0.b32.end [16/16] 0.0, 128
    %v46 = vpop.trf.xlu0
    %v47 = vpop.trf.xlu0
    %v48 = vpop.trf.xlu0
    %v49 = vpop.trf.xlu0
    %v50 = vpop.trf.xlu0
    %v51 = vpop.trf.xlu0
    %v52 = vpop.trf.xlu0
    %v53 = vpop.trf.xlu0
    %v54 = vpop.trf.xlu0
    %v55 = vpop.trf.xlu0
    %v56 = vpop.trf.xlu0
    %v57 = vpop.trf.xlu0
    %v58 = vpop.trf.xlu0
    %v59 = vpop.trf.xlu0
    %v60 = vpop.trf.xlu0
    %v61 = vpop.trf.xlu0
    %62 = vxpose.xlu0.b32.start [1/16] %v27, 128
    %63 = vxpose.xlu0.b32.cont [2/16] 0.0, 128
    %64 = vxpose.xlu0.b32.cont [3/16] 0.0, 128
    %65 = vxpose.xlu0.b32.cont [4/16] 0.0, 128
    %66 = vxpose.xlu0.b32.cont [5/16] 0.0, 128
    %67 = vxpose.xlu0.b32.cont [6/16] 0.0, 128
    %68 = vxpose.xlu0.b32.cont [7/16] 0.0, 128
    %69 = vxpose.xlu0.b32.cont [8/16] 0.0, 128
    %70 = vxpose.xlu0.b32.cont [9/16] 0.0, 128
    %71 = vxpose.xlu0.b32.cont [10/16] 0.0, 128
    %72 = vxpose.xlu0.b32.cont [11/16] 0.0, 128
    %73 = vxpose.xlu0.b32.cont [12/16] 0.0, 128
    %74 = vxpose.xlu0.b32.cont [13/16] 0.0, 128
    %75 = vxpose.xlu0.b32.cont [14/16] 0.0, 128
    %76 = vxpose.xlu0.b32.cont [15/16] 0.0, 128
    %77 = vxpose.xlu0.b32.end [16/16] 0.0, 128
    %v78 = vpop.trf.xlu0
    %v79 = vpop.trf.xlu0
    %v80 = vpop.trf.xlu0
    %v81 = vpop.trf.xlu0
    %v82 = vpop.trf.xlu0
    %v83 = vpop.trf.xlu0
    %v84 = vpop.trf.xlu0
    %v85 = vpop.trf.xlu0
    %v86 = vpop.trf.xlu0
    %v87 = vpop.trf.xlu0
    %v88 = vpop.trf.xlu0
    %v89 = vpop.trf.xlu0
    %v90 = vpop.trf.xlu0
    %v91 = vpop.trf.xlu0
    %v92 = vpop.trf.xlu0
    %v93 = vpop.trf.xlu0
    %v94 = vmul.f32 %v46, %v46
    %v95 = vmul.f32 %v47, %v47
    %v96 = vmul.f32 %v48, %v48
    %v97 = vmul.f32 %v49, %v49
    %vm98 = vcmask 15360
    %v99 = vsel %vm98, %v94, 0.0
    %v100 = vsel %vm98, %v95, 0.0
    %v101 = vadd.f32 %v99, %v100
    %v102 = vsel %vm98, %v96, 0.0
    %v103 = vadd.f32 %v101, %v102
    %v104 = vsel %vm98, %v97, 0.0
    %v105 = vadd.f32 %v103, %v104
    %v106 = vrot.slane %v105, 4
    %v107 = vadd.f32 %v105, %v106
    %v108 = vrot.slane %v107, 2
    %v109 = vadd.f32 %v107, %v108
    %v110 = vrot.slane %v109, 1
    %v111 = vadd.f32 %v109, %v110
    %v112 = vmax.f32 %v111, 1e-24
    %v113 = vrsqrt.pop %v112
    %v114 = vmul.f32 %v113, %v112
    %v115 = vmul.f32 %v114, %v113
    %v116 = vmul.f32 0.5, %v115
    %v117 = vsub.f32 1.5, %v116
    %v118 = vmul.f32 %v113, %v117
    %vm119 = vweird.f32 %v112
    %vm120 = vweird.f32 %v113
    %vm121 = vmor %vm119, %vm120
    %v122 = vsel %vm121, %v113, %v118
    %v123 = vmul.f32 %v46, %v122
    %v124 = vmul.f32 %v47, %v122
    %v125 = vmul.f32 %v48, %v122
    %v126 = vmul.f32 %v49, %v122
    %v127 = vmul.f32 %v50, %v50
    %v128 = vmul.f32 %v51, %v51
    %v129 = vmul.f32 %v52, %v52
    %v130 = vmul.f32 %v53, %v53
    %v131 = vsel %vm98, %v127, 0.0
    %v132 = vsel %vm98, %v128, 0.0
    %v133 = vadd.f32 %v131, %v132
    %v134 = vsel %vm98, %v129, 0.0
    %v135 = vadd.f32 %v133, %v134
    %v136 = vsel %vm98, %v130, 0.0
    %v137 = vadd.f32 %v135, %v136
    %v138 = vrot.slane %v137, 4
    %v139 = vadd.f32 %v137, %v138
    %v140 = vrot.slane %v139, 2
    %v141 = vadd.f32 %v139, %v140
    %v142 = vrot.slane %v141, 1
    %v143 = vadd.f32 %v141, %v142
    %v144 = vmax.f32 %v143, 1e-24
    %v145 = vrsqrt.pop %v144
    %v146 = vmul.f32 %v145, %v144
    %v147 = vmul.f32 %v146, %v145
    %v148 = vmul.f32 0.5, %v147
    %v149 = vsub.f32 1.5, %v148
    %v150 = vmul.f32 %v145, %v149
    %vm151 = vweird.f32 %v144
    %vm152 = vweird.f32 %v145
    %vm153 = vmor %vm151, %vm152
    %v154 = vsel %vm153, %v145, %v150
    %v155 = vmul.f32 %v50, %v154
    %v156 = vmul.f32 %v51, %v154
    %v157 = vmul.f32 %v52, %v154
    %v158 = vmul.f32 %v53, %v154
    %v159 = vmul.f32 %v54, %v54
    %v160 = vmul.f32 %v55, %v55
    %v161 = vmul.f32 %v56, %v56
    %v162 = vmul.f32 %v57, %v57
    %v163 = vsel %vm98, %v159, 0.0
    %v164 = vsel %vm98, %v160, 0.0
    %v165 = vadd.f32 %v163, %v164
    %v166 = vsel %vm98, %v161, 0.0
    %v167 = vadd.f32 %v165, %v166
    %v168 = vsel %vm98, %v162, 0.0
    %v169 = vadd.f32 %v167, %v168
    %v170 = vrot.slane %v169, 4
    %v171 = vadd.f32 %v169, %v170
    %v172 = vrot.slane %v171, 2
    %v173 = vadd.f32 %v171, %v172
    %v174 = vrot.slane %v173, 1
    %v175 = vadd.f32 %v173, %v174
    %v176 = vmax.f32 %v175, 1e-24
    %v177 = vrsqrt.pop %v176
    %v178 = vmul.f32 %v177, %v176
    %v179 = vmul.f32 %v178, %v177
    %v180 = vmul.f32 0.5, %v179
    %v181 = vsub.f32 1.5, %v180
    %v182 = vmul.f32 %v177, %v181
    %vm183 = vweird.f32 %v176
    %vm184 = vweird.f32 %v177
    %vm185 = vmor %vm183, %vm184
    %v186 = vsel %vm185, %v177, %v182
    %v187 = vmul.f32 %v54, %v186
    %v188 = vmul.f32 %v55, %v186
    %v189 = vmul.f32 %v56, %v186
    %v190 = vmul.f32 %v57, %v186
    %v191 = vmul.f32 %v58, %v58
    %v192 = vmul.f32 %v59, %v59
    %v193 = vmul.f32 %v60, %v60
    %v194 = vmul.f32 %v61, %v61
    %v195 = vsel %vm98, %v191, 0.0
    %v196 = vsel %vm98, %v192, 0.0
    %v197 = vadd.f32 %v195, %v196
    %v198 = vsel %vm98, %v193, 0.0
    %v199 = vadd.f32 %v197, %v198
    %v200 = vsel %vm98, %v194, 0.0
    %v201 = vadd.f32 %v199, %v200
    %v202 = vrot.slane %v201, 4
    %v203 = vadd.f32 %v201, %v202
    %v204 = vrot.slane %v203, 2
    %v205 = vadd.f32 %v203, %v204
    %v206 = vrot.slane %v205, 1
    %v207 = vadd.f32 %v205, %v206
    %v208 = vmax.f32 %v207, 1e-24
    %v209 = vrsqrt.pop %v208
    %v210 = vmul.f32 %v209, %v208
    %v211 = vmul.f32 %v210, %v209
    %v212 = vmul.f32 0.5, %v211
    %v213 = vsub.f32 1.5, %v212
    %v214 = vmul.f32 %v209, %v213
    %vm215 = vweird.f32 %v208
    %vm216 = vweird.f32 %v209
    %vm217 = vmor %vm215, %vm216
    %v218 = vsel %vm217, %v209, %v214
    %v219 = vmul.f32 %v58, %v218
    %v220 = vmul.f32 %v59, %v218
    %v221 = vmul.f32 %v60, %v218
    %v222 = vmul.f32 %v61, %v218
    %v223 = vmul.f32 %v78, %v78
    %v224 = vmul.f32 %v79, %v79
    %v225 = vmul.f32 %v80, %v80
    %v226 = vmul.f32 %v81, %v81
    %v227 = vsel %vm98, %v223, 0.0
    %v228 = vsel %vm98, %v224, 0.0
    %v229 = vadd.f32 %v227, %v228
    %v230 = vsel %vm98, %v225, 0.0
    %v231 = vadd.f32 %v229, %v230
    %v232 = vsel %vm98, %v226, 0.0
    %v233 = vadd.f32 %v231, %v232
    %v234 = vrot.slane %v233, 4
    %v235 = vadd.f32 %v233, %v234
    %v236 = vrot.slane %v235, 2
    %v237 = vadd.f32 %v235, %v236
    %v238 = vrot.slane %v237, 1
    %v239 = vadd.f32 %v237, %v238
    %v240 = vmax.f32 %v239, 1e-24
    %v241 = vrsqrt.pop %v240
    %v242 = vmul.f32 %v241, %v240
    %v243 = vmul.f32 %v242, %v241
    %v244 = vmul.f32 0.5, %v243
    %v245 = vsub.f32 1.5, %v244
    %v246 = vmul.f32 %v241, %v245
    %vm247 = vweird.f32 %v240
    %vm248 = vweird.f32 %v241
    %vm249 = vmor %vm247, %vm248
    %v250 = vsel %vm249, %v241, %v246
    %v251 = vmul.f32 %v78, %v250
    %v252 = vmul.f32 %v79, %v250
    %v253 = vmul.f32 %v80, %v250
    %v254 = vmul.f32 %v81, %v250
    %v255 = vmul.f32 %v82, %v82
    %v256 = vmul.f32 %v83, %v83
    %v257 = vmul.f32 %v84, %v84
    %v258 = vmul.f32 %v85, %v85
    %v259 = vsel %vm98, %v255, 0.0
    %v260 = vsel %vm98, %v256, 0.0
    %v261 = vadd.f32 %v259, %v260
    %v262 = vsel %vm98, %v257, 0.0
    %v263 = vadd.f32 %v261, %v262
    %v264 = vsel %vm98, %v258, 0.0
    %v265 = vadd.f32 %v263, %v264
    %v266 = vrot.slane %v265, 4
    %v267 = vadd.f32 %v265, %v266
    %v268 = vrot.slane %v267, 2
    %v269 = vadd.f32 %v267, %v268
    %v270 = vrot.slane %v269, 1
    %v271 = vadd.f32 %v269, %v270
    %v272 = vmax.f32 %v271, 1e-24
    %v273 = vrsqrt.pop %v272
    %v274 = vmul.f32 %v273, %v272
    %v275 = vmul.f32 %v274, %v273
    %v276 = vmul.f32 0.5, %v275
    %v277 = vsub.f32 1.5, %v276
    %v278 = vmul.f32 %v273, %v277
    %vm279 = vweird.f32 %v272
    %vm280 = vweird.f32 %v273
    %vm281 = vmor %vm279, %vm280
    %v282 = vsel %vm281, %v273, %v278
    %v283 = vmul.f32 %v82, %v282
    %v284 = vmul.f32 %v83, %v282
    %v285 = vmul.f32 %v84, %v282
    %v286 = vmul.f32 %v85, %v282
    %v287 = vmul.f32 %v86, %v86
    %v288 = vmul.f32 %v87, %v87
    %v289 = vmul.f32 %v88, %v88
    %v290 = vmul.f32 %v89, %v89
    %v291 = vsel %vm98, %v287, 0.0
    %v292 = vsel %vm98, %v288, 0.0
    %v293 = vadd.f32 %v291, %v292
    %v294 = vsel %vm98, %v289, 0.0
    %v295 = vadd.f32 %v293, %v294
    %v296 = vsel %vm98, %v290, 0.0
    %v297 = vadd.f32 %v295, %v296
    %v298 = vrot.slane %v297, 4
    %v299 = vadd.f32 %v297, %v298
    %v300 = vrot.slane %v299, 2
    %v301 = vadd.f32 %v299, %v300
    %v302 = vrot.slane %v301, 1
    %v303 = vadd.f32 %v301, %v302
    %v304 = vmax.f32 %v303, 1e-24
    %v305 = vrsqrt.pop %v304
    %v306 = vmul.f32 %v305, %v304
    %v307 = vmul.f32 %v306, %v305
    %v308 = vmul.f32 0.5, %v307
    %v309 = vsub.f32 1.5, %v308
    %v310 = vmul.f32 %v305, %v309
    %vm311 = vweird.f32 %v304
    %vm312 = vweird.f32 %v305
    %vm313 = vmor %vm311, %vm312
    %v314 = vsel %vm313, %v305, %v310
    %v315 = vmul.f32 %v86, %v314
    %v316 = vmul.f32 %v87, %v314
    %v317 = vmul.f32 %v88, %v314
    %v318 = vmul.f32 %v89, %v314
    %v319 = vmul.f32 %v90, %v90
    %v320 = vmul.f32 %v91, %v91
    %v321 = vmul.f32 %v92, %v92
    %v322 = vmul.f32 %v93, %v93
    %v323 = vsel %vm98, %v319, 0.0
    %v324 = vsel %vm98, %v320, 0.0
    %v325 = vadd.f32 %v323, %v324
    %v326 = vsel %vm98, %v321, 0.0
    %v327 = vadd.f32 %v325, %v326
    %v328 = vsel %vm98, %v322, 0.0
    %v329 = vadd.f32 %v327, %v328
    %v330 = vrot.slane %v329, 4
    %v331 = vadd.f32 %v329, %v330
    %v332 = vrot.slane %v331, 2
    %v333 = vadd.f32 %v331, %v332
    %v334 = vrot.slane %v333, 1
    %v335 = vadd.f32 %v333, %v334
    %v336 = vmax.f32 %v335, 1e-24
    %v337 = vrsqrt.pop %v336
    %v338 = vmul.f32 %v337, %v336
    %v339 = vmul.f32 %v338, %v337
    %v340 = vmul.f32 0.5, %v339
    %v341 = vsub.f32 1.5, %v340
    %v342 = vmul.f32 %v337, %v341
    %vm343 = vweird.f32 %v336
    %vm344 = vweird.f32 %v337
    %vm345 = vmor %vm343, %vm344
    %v346 = vsel %vm345, %v337, %v342
    %v347 = vmul.f32 %v90, %v346
    %v348 = vmul.f32 %v91, %v346
    %v349 = vmul.f32 %v92, %v346
    %v350 = vmul.f32 %v93, %v346
    %v351 = vmul.f32 %v155, %v123
    %v352 = vmul.f32 %v156, %v124
    %v353 = vmul.f32 %v157, %v125
    %v354 = vmul.f32 %v158, %v126
    %v355 = vsel %vm98, %v351, 0.0
    %v356 = vsel %vm98, %v352, 0.0
    %v357 = vadd.f32 %v355, %v356
    %v358 = vsel %vm98, %v353, 0.0
    %v359 = vadd.f32 %v357, %v358
    %v360 = vsel %vm98, %v354, 0.0
    %v361 = vadd.f32 %v359, %v360
    %v362 = vrot.slane %v361, 4
    %v363 = vadd.f32 %v361, %v362
    %v364 = vrot.slane %v363, 2
    %v365 = vadd.f32 %v363, %v364
    %v366 = vrot.slane %v365, 1
    %v367 = vadd.f32 %v365, %v366
    %v368 = vmul.f32 %v367, 10.0
    %v369 = vmul.f32 %v187, %v123
    %v370 = vmul.f32 %v188, %v124
    %v371 = vmul.f32 %v189, %v125
    %v372 = vmul.f32 %v190, %v126
    %v373 = vsel %vm98, %v369, 0.0
    %v374 = vsel %vm98, %v370, 0.0
    %v375 = vadd.f32 %v373, %v374
    %v376 = vsel %vm98, %v371, 0.0
    %v377 = vadd.f32 %v375, %v376
    %v378 = vsel %vm98, %v372, 0.0
    %v379 = vadd.f32 %v377, %v378
    %v380 = vrot.slane %v379, 4
    %v381 = vadd.f32 %v379, %v380
    %v382 = vrot.slane %v381, 2
    %v383 = vadd.f32 %v381, %v382
    %v384 = vrot.slane %v383, 1
    %v385 = vadd.f32 %v383, %v384
    %v386 = vmul.f32 %v385, 10.0
    %v387 = vmul.f32 %v219, %v123
    %v388 = vmul.f32 %v220, %v124
    %v389 = vmul.f32 %v221, %v125
    %v390 = vmul.f32 %v222, %v126
    %v391 = vsel %vm98, %v387, 0.0
    %v392 = vsel %vm98, %v388, 0.0
    %v393 = vadd.f32 %v391, %v392
    %v394 = vsel %vm98, %v389, 0.0
    %v395 = vadd.f32 %v393, %v394
    %v396 = vsel %vm98, %v390, 0.0
    %v397 = vadd.f32 %v395, %v396
    %v398 = vrot.slane %v397, 4
    %v399 = vadd.f32 %v397, %v398
    %v400 = vrot.slane %v399, 2
    %v401 = vadd.f32 %v399, %v400
    %v402 = vrot.slane %v401, 1
    %v403 = vadd.f32 %v401, %v402
    %v404 = vmul.f32 %v403, 10.0
    %v405 = vmul.f32 %v251, %v123
    %v406 = vmul.f32 %v252, %v124
    %v407 = vmul.f32 %v253, %v125
    %v408 = vmul.f32 %v254, %v126
    %v409 = vsel %vm98, %v405, 0.0
    %v410 = vsel %vm98, %v406, 0.0
    %v411 = vadd.f32 %v409, %v410
    %v412 = vsel %vm98, %v407, 0.0
    %v413 = vadd.f32 %v411, %v412
    %v414 = vsel %vm98, %v408, 0.0
    %v415 = vadd.f32 %v413, %v414
    %v416 = vrot.slane %v415, 4
    %v417 = vadd.f32 %v415, %v416
    %v418 = vrot.slane %v417, 2
    %v419 = vadd.f32 %v417, %v418
    %v420 = vrot.slane %v419, 1
    %v421 = vadd.f32 %v419, %v420
    %v422 = vmul.f32 %v421, 10.0
    %v423 = vmul.f32 %v283, %v123
    %v424 = vmul.f32 %v284, %v124
    %v425 = vmul.f32 %v285, %v125
    %v426 = vmul.f32 %v286, %v126
    %v427 = vsel %vm98, %v423, 0.0
    %v428 = vsel %vm98, %v424, 0.0
    %v429 = vadd.f32 %v427, %v428
    %v430 = vsel %vm98, %v425, 0.0
    %v431 = vadd.f32 %v429, %v430
    %v432 = vsel %vm98, %v426, 0.0
    %v433 = vadd.f32 %v431, %v432
    %v434 = vrot.slane %v433, 4
    %v435 = vadd.f32 %v433, %v434
    %v436 = vrot.slane %v435, 2
    %v437 = vadd.f32 %v435, %v436
    %v438 = vrot.slane %v437, 1
    %v439 = vadd.f32 %v437, %v438
    %v440 = vmul.f32 %v439, 10.0
    %v441 = vmul.f32 %v315, %v123
    %v442 = vmul.f32 %v316, %v124
    %v443 = vmul.f32 %v317, %v125
    %v444 = vmul.f32 %v318, %v126
    %v445 = vsel %vm98, %v441, 0.0
    %v446 = vsel %vm98, %v442, 0.0
    %v447 = vadd.f32 %v445, %v446
    %v448 = vsel %vm98, %v443, 0.0
    %v449 = vadd.f32 %v447, %v448
    %v450 = vsel %vm98, %v444, 0.0
    %v451 = vadd.f32 %v449, %v450
    %v452 = vrot.slane %v451, 4
    %v453 = vadd.f32 %v451, %v452
    %v454 = vrot.slane %v453, 2
    %v455 = vadd.f32 %v453, %v454
    %v456 = vrot.slane %v455, 1
    %v457 = vadd.f32 %v455, %v456
    %v458 = vmul.f32 %v457, 10.0
    %v459 = vmul.f32 %v347, %v123
    %v460 = vmul.f32 %v348, %v124
    %v461 = vmul.f32 %v349, %v125
    %v462 = vmul.f32 %v350, %v126
    %v463 = vsel %vm98, %v459, 0.0
    %v464 = vsel %vm98, %v460, 0.0
    %v465 = vadd.f32 %v463, %v464
    %v466 = vsel %vm98, %v461, 0.0
    %v467 = vadd.f32 %v465, %v466
    %v468 = vsel %vm98, %v462, 0.0
    %v469 = vadd.f32 %v467, %v468
    %v470 = vrot.slane %v469, 4
    %v471 = vadd.f32 %v469, %v470
    %v472 = vrot.slane %v471, 2
    %v473 = vadd.f32 %v471, %v472
    %v474 = vrot.slane %v473, 1
    %v475 = vadd.f32 %v473, %v474
    %v476 = vmul.f32 %v475, 10.0
    %v477 = vmul.f32 %v368, 1.442695
    %v478 = vpow.pop %v477
    %v479 = vmul.f32 %v386, 1.442695
    %v480 = vpow.pop %v479
    %v481 = vmul.f32 %v404, 1.442695
    %v482 = vpow.pop %v481
    %v483 = vmul.f32 %v422, 1.442695
    %v484 = vpow.pop %v483
    %v485 = vmul.f32 %v440, 1.442695
    %v486 = vpow.pop %v485
    %v487 = vmul.f32 %v458, 1.442695
    %v488 = vpow.pop %v487
    %v489 = vmul.f32 %v476, 1.442695
    %v490 = vpow.pop %v489
    %v491 = vmul.f32 %v155, %v187
    %v492 = vmul.f32 %v156, %v188
    %v493 = vmul.f32 %v157, %v189
    %v494 = vmul.f32 %v158, %v190
    %v495 = vsel %vm98, %v491, 0.0
    %v496 = vsel %vm98, %v492, 0.0
    %v497 = vadd.f32 %v495, %v496
    %v498 = vsel %vm98, %v493, 0.0
    %v499 = vadd.f32 %v497, %v498
    %v500 = vsel %vm98, %v494, 0.0
    %v501 = vadd.f32 %v499, %v500
    %v502 = vrot.slane %v501, 4
    %v503 = vadd.f32 %v501, %v502
    %v504 = vrot.slane %v503, 2
    %v505 = vadd.f32 %v503, %v504
    %v506 = vrot.slane %v505, 1
    %v507 = vadd.f32 %v505, %v506
    %v508 = vmul.f32 %v507, 10.0
    %v509 = vmul.f32 %v508, 1.442695
    %v510 = vpow.pop %v509
    %v511 = vmul.f32 %v155, %v219
    %v512 = vmul.f32 %v156, %v220
    %v513 = vmul.f32 %v157, %v221
    %v514 = vmul.f32 %v158, %v222
    %v515 = vsel %vm98, %v511, 0.0
    %v516 = vsel %vm98, %v512, 0.0
    %v517 = vadd.f32 %v515, %v516
    %v518 = vsel %vm98, %v513, 0.0
    %v519 = vadd.f32 %v517, %v518
    %v520 = vsel %vm98, %v514, 0.0
    %v521 = vadd.f32 %v519, %v520
    %v522 = vrot.slane %v521, 4
    %v523 = vadd.f32 %v521, %v522
    %v524 = vrot.slane %v523, 2
    %v525 = vadd.f32 %v523, %v524
    %v526 = vrot.slane %v525, 1
    %v527 = vadd.f32 %v525, %v526
    %v528 = vmul.f32 %v527, 10.0
    %v529 = vmul.f32 %v528, 1.442695
    %v530 = vpow.pop %v529
    %v531 = vmul.f32 %v155, %v251
    %v532 = vmul.f32 %v156, %v252
    %v533 = vmul.f32 %v157, %v253
    %v534 = vmul.f32 %v158, %v254
    %v535 = vsel %vm98, %v531, 0.0
    %v536 = vsel %vm98, %v532, 0.0
    %v537 = vadd.f32 %v535, %v536
    %v538 = vsel %vm98, %v533, 0.0
    %v539 = vadd.f32 %v537, %v538
    %v540 = vsel %vm98, %v534, 0.0
    %v541 = vadd.f32 %v539, %v540
    %v542 = vrot.slane %v541, 4
    %v543 = vadd.f32 %v541, %v542
    %v544 = vrot.slane %v543, 2
    %v545 = vadd.f32 %v543, %v544
    %v546 = vrot.slane %v545, 1
    %v547 = vadd.f32 %v545, %v546
    %v548 = vmul.f32 %v547, 10.0
    %v549 = vmul.f32 %v548, 1.442695
    %v550 = vpow.pop %v549
    %v551 = vmul.f32 %v155, %v283
    %v552 = vmul.f32 %v156, %v284
    %v553 = vmul.f32 %v157, %v285
    %v554 = vmul.f32 %v158, %v286
    %v555 = vsel %vm98, %v551, 0.0
    %v556 = vsel %vm98, %v552, 0.0
    %v557 = vadd.f32 %v555, %v556
    %v558 = vsel %vm98, %v553, 0.0
    %v559 = vadd.f32 %v557, %v558
    %v560 = vsel %vm98, %v554, 0.0
    %v561 = vadd.f32 %v559, %v560
    %v562 = vrot.slane %v561, 4
    %v563 = vadd.f32 %v561, %v562
    %v564 = vrot.slane %v563, 2
    %v565 = vadd.f32 %v563, %v564
    %v566 = vrot.slane %v565, 1
    %v567 = vadd.f32 %v565, %v566
    %v568 = vmul.f32 %v567, 10.0
    %v569 = vmul.f32 %v568, 1.442695
    %v570 = vpow.pop %v569
    %v571 = vmul.f32 %v155, %v315
    %v572 = vmul.f32 %v156, %v316
    %v573 = vmul.f32 %v157, %v317
    %v574 = vmul.f32 %v158, %v318
    %v575 = vsel %vm98, %v571, 0.0
    %v576 = vsel %vm98, %v572, 0.0
    %v577 = vadd.f32 %v575, %v576
    %v578 = vsel %vm98, %v573, 0.0
    %v579 = vadd.f32 %v577, %v578
    %v580 = vsel %vm98, %v574, 0.0
    %v581 = vadd.f32 %v579, %v580
    %v582 = vrot.slane %v581, 4
    %v583 = vadd.f32 %v581, %v582
    %v584 = vrot.slane %v583, 2
    %v585 = vadd.f32 %v583, %v584
    %v586 = vrot.slane %v585, 1
    %v587 = vadd.f32 %v585, %v586
    %v588 = vmul.f32 %v587, 10.0
    %v589 = vmul.f32 %v588, 1.442695
    %v590 = vpow.pop %v589
    %v591 = vmul.f32 %v155, %v347
    %v592 = vmul.f32 %v156, %v348
    %v593 = vmul.f32 %v157, %v349
    %v594 = vmul.f32 %v158, %v350
    %v595 = vsel %vm98, %v591, 0.0
    %v596 = vsel %vm98, %v592, 0.0
    %v597 = vadd.f32 %v595, %v596
    %v598 = vsel %vm98, %v593, 0.0
    %v599 = vadd.f32 %v597, %v598
    %v600 = vsel %vm98, %v594, 0.0
    %v601 = vadd.f32 %v599, %v600
    %v602 = vrot.slane %v601, 4
    %v603 = vadd.f32 %v601, %v602
    %v604 = vrot.slane %v603, 2
    %v605 = vadd.f32 %v603, %v604
    %v606 = vrot.slane %v605, 1
    %v607 = vadd.f32 %v605, %v606
    %v608 = vmul.f32 %v607, 10.0
    %v609 = vmul.f32 %v608, 1.442695
    %v610 = vpow.pop %v609
    %v611 = vmul.f32 %v187, %v219
    %v612 = vmul.f32 %v188, %v220
    %v613 = vmul.f32 %v189, %v221
    %v614 = vmul.f32 %v190, %v222
    %v615 = vsel %vm98, %v611, 0.0
    %v616 = vsel %vm98, %v612, 0.0
    %v617 = vadd.f32 %v615, %v616
    %v618 = vsel %vm98, %v613, 0.0
    %v619 = vadd.f32 %v617, %v618
    %v620 = vsel %vm98, %v614, 0.0
    %v621 = vadd.f32 %v619, %v620
    %v622 = vrot.slane %v621, 4
    %v623 = vadd.f32 %v621, %v622
    %v624 = vrot.slane %v623, 2
    %v625 = vadd.f32 %v623, %v624
    %v626 = vrot.slane %v625, 1
    %v627 = vadd.f32 %v625, %v626
    %v628 = vmul.f32 %v627, 10.0
    %v629 = vmul.f32 %v628, 1.442695
    %v630 = vpow.pop %v629
    %v631 = vmul.f32 %v187, %v251
    %v632 = vmul.f32 %v188, %v252
    %v633 = vmul.f32 %v189, %v253
    %v634 = vmul.f32 %v190, %v254
    %v635 = vsel %vm98, %v631, 0.0
    %v636 = vsel %vm98, %v632, 0.0
    %v637 = vadd.f32 %v635, %v636
    %v638 = vsel %vm98, %v633, 0.0
    %v639 = vadd.f32 %v637, %v638
    %v640 = vsel %vm98, %v634, 0.0
    %v641 = vadd.f32 %v639, %v640
    %v642 = vrot.slane %v641, 4
    %v643 = vadd.f32 %v641, %v642
    %v644 = vrot.slane %v643, 2
    %v645 = vadd.f32 %v643, %v644
    %v646 = vrot.slane %v645, 1
    %v647 = vadd.f32 %v645, %v646
    %v648 = vmul.f32 %v647, 10.0
    %v649 = vmul.f32 %v648, 1.442695
    %v650 = vpow.pop %v649
    %v651 = vmul.f32 %v187, %v283
    %v652 = vmul.f32 %v188, %v284
    %v653 = vmul.f32 %v189, %v285
    %v654 = vmul.f32 %v190, %v286
    %v655 = vsel %vm98, %v651, 0.0
    %v656 = vsel %vm98, %v652, 0.0
    %v657 = vadd.f32 %v655, %v656
    %v658 = vsel %vm98, %v653, 0.0
    %v659 = vadd.f32 %v657, %v658
    %v660 = vsel %vm98, %v654, 0.0
    %v661 = vadd.f32 %v659, %v660
    %v662 = vrot.slane %v661, 4
    %v663 = vadd.f32 %v661, %v662
    %v664 = vrot.slane %v663, 2
    %v665 = vadd.f32 %v663, %v664
    %v666 = vrot.slane %v665, 1
    %v667 = vadd.f32 %v665, %v666
    %v668 = vmul.f32 %v667, 10.0
    %v669 = vmul.f32 %v668, 1.442695
    %v670 = vpow.pop %v669
    %v671 = vmul.f32 %v187, %v315
    %v672 = vmul.f32 %v188, %v316
    %v673 = vmul.f32 %v189, %v317
    %v674 = vmul.f32 %v190, %v318
    %v675 = vsel %vm98, %v671, 0.0
    %v676 = vsel %vm98, %v672, 0.0
    %v677 = vadd.f32 %v675, %v676
    %v678 = vsel %vm98, %v673, 0.0
    %v679 = vadd.f32 %v677, %v678
    %v680 = vsel %vm98, %v674, 0.0
    %v681 = vadd.f32 %v679, %v680
    %v682 = vrot.slane %v681, 4
    %v683 = vadd.f32 %v681, %v682
    %v684 = vrot.slane %v683, 2
    %v685 = vadd.f32 %v683, %v684
    %v686 = vrot.slane %v685, 1
    %v687 = vadd.f32 %v685, %v686
    %v688 = vmul.f32 %v687, 10.0
    %v689 = vmul.f32 %v688, 1.442695
    %v690 = vpow.pop %v689
    %v691 = vmul.f32 %v187, %v347
    %v692 = vmul.f32 %v188, %v348
    %v693 = vmul.f32 %v189, %v349
    %v694 = vmul.f32 %v190, %v350
    %v695 = vsel %vm98, %v691, 0.0
    %v696 = vsel %vm98, %v692, 0.0
    %v697 = vadd.f32 %v695, %v696
    %v698 = vsel %vm98, %v693, 0.0
    %v699 = vadd.f32 %v697, %v698
    %v700 = vsel %vm98, %v694, 0.0
    %v701 = vadd.f32 %v699, %v700
    %v702 = vrot.slane %v701, 4
    %v703 = vadd.f32 %v701, %v702
    %v704 = vrot.slane %v703, 2
    %v705 = vadd.f32 %v703, %v704
    %v706 = vrot.slane %v705, 1
    %v707 = vadd.f32 %v705, %v706
    %v708 = vmul.f32 %v707, 10.0
    %v709 = vmul.f32 %v708, 1.442695
    %v710 = vpow.pop %v709
    %v711 = vmul.f32 %v219, %v251
    %v712 = vmul.f32 %v220, %v252
    %v713 = vmul.f32 %v221, %v253
    %v714 = vmul.f32 %v222, %v254
    %v715 = vsel %vm98, %v711, 0.0
    %v716 = vsel %vm98, %v712, 0.0
    %v717 = vadd.f32 %v715, %v716
    %v718 = vsel %vm98, %v713, 0.0
    %v719 = vadd.f32 %v717, %v718
    %v720 = vsel %vm98, %v714, 0.0
    %v721 = vadd.f32 %v719, %v720
    %v722 = vrot.slane %v721, 4
    %v723 = vadd.f32 %v721, %v722
    %v724 = vrot.slane %v723, 2
    %v725 = vadd.f32 %v723, %v724
    %v726 = vrot.slane %v725, 1
    %v727 = vadd.f32 %v725, %v726
    %v728 = vmul.f32 %v727, 10.0
    %v729 = vmul.f32 %v728, 1.442695
    %v730 = vpow.pop %v729
    %v731 = vmul.f32 %v219, %v283
    %v732 = vmul.f32 %v220, %v284
    %v733 = vmul.f32 %v221, %v285
    %v734 = vmul.f32 %v222, %v286
    %v735 = vsel %vm98, %v731, 0.0
    %v736 = vsel %vm98, %v732, 0.0
    %v737 = vadd.f32 %v735, %v736
    %v738 = vsel %vm98, %v733, 0.0
    %v739 = vadd.f32 %v737, %v738
    %v740 = vsel %vm98, %v734, 0.0
    %v741 = vadd.f32 %v739, %v740
    %v742 = vrot.slane %v741, 4
    %v743 = vadd.f32 %v741, %v742
    %v744 = vrot.slane %v743, 2
    %v745 = vadd.f32 %v743, %v744
    %v746 = vrot.slane %v745, 1
    %v747 = vadd.f32 %v745, %v746
    %v748 = vmul.f32 %v747, 10.0
    %v749 = vmul.f32 %v748, 1.442695
    %v750 = vpow.pop %v749
    %v751 = vmul.f32 %v219, %v315
    %v752 = vmul.f32 %v220, %v316
    %v753 = vmul.f32 %v221, %v317
    %v754 = vmul.f32 %v222, %v318
    %v755 = vsel %vm98, %v751, 0.0
    %v756 = vsel %vm98, %v752, 0.0
    %v757 = vadd.f32 %v755, %v756
    %v758 = vsel %vm98, %v753, 0.0
    %v759 = vadd.f32 %v757, %v758
    %v760 = vsel %vm98, %v754, 0.0
    %v761 = vadd.f32 %v759, %v760
    %v762 = vrot.slane %v761, 4
    %v763 = vadd.f32 %v761, %v762
    %v764 = vrot.slane %v763, 2
    %v765 = vadd.f32 %v763, %v764
    %v766 = vrot.slane %v765, 1
    %v767 = vadd.f32 %v765, %v766
    %v768 = vmul.f32 %v767, 10.0
    %v769 = vmul.f32 %v768, 1.442695
    %v770 = vpow.pop %v769
    %v771 = vmul.f32 %v219, %v347
    %v772 = vmul.f32 %v220, %v348
    %v773 = vmul.f32 %v221, %v349
    %v774 = vmul.f32 %v222, %v350
    %v775 = vsel %vm98, %v771, 0.0
    %v776 = vsel %vm98, %v772, 0.0
    %v777 = vadd.f32 %v775, %v776
    %v778 = vsel %vm98, %v773, 0.0
    %v779 = vadd.f32 %v777, %v778
    %v780 = vsel %vm98, %v774, 0.0
    %v781 = vadd.f32 %v779, %v780
    %v782 = vrot.slane %v781, 4
    %v783 = vadd.f32 %v781, %v782
    %v784 = vrot.slane %v783, 2
    %v785 = vadd.f32 %v783, %v784
    %v786 = vrot.slane %v785, 1
    %v787 = vadd.f32 %v785, %v786
    %v788 = vmul.f32 %v787, 10.0
    %v789 = vmul.f32 %v788, 1.442695
    %v790 = vpow.pop %v789
    %v791 = vmul.f32 %v251, %v283
    %v792 = vmul.f32 %v252, %v284
    %v793 = vmul.f32 %v253, %v285
    %v794 = vmul.f32 %v254, %v286
    %v795 = vsel %vm98, %v791, 0.0
    %v796 = vsel %vm98, %v792, 0.0
    %v797 = vadd.f32 %v795, %v796
    %v798 = vsel %vm98, %v793, 0.0
    %v799 = vadd.f32 %v797, %v798
    %v800 = vsel %vm98, %v794, 0.0
    %v801 = vadd.f32 %v799, %v800
    %v802 = vrot.slane %v801, 4
    %v803 = vadd.f32 %v801, %v802
    %v804 = vrot.slane %v803, 2
    %v805 = vadd.f32 %v803, %v804
    %v806 = vrot.slane %v805, 1
    %v807 = vadd.f32 %v805, %v806
    %v808 = vmul.f32 %v807, 10.0
    %v809 = vmul.f32 %v808, 1.442695
    %v810 = vpow.pop %v809
    %v811 = vmul.f32 %v251, %v315
    %v812 = vmul.f32 %v252, %v316
    %v813 = vmul.f32 %v253, %v317
    %v814 = vmul.f32 %v254, %v318
    %v815 = vsel %vm98, %v811, 0.0
    %v816 = vsel %vm98, %v812, 0.0
    %v817 = vadd.f32 %v815, %v816
    %v818 = vsel %vm98, %v813, 0.0
    %v819 = vadd.f32 %v817, %v818
    %v820 = vsel %vm98, %v814, 0.0
    %v821 = vadd.f32 %v819, %v820
    %v822 = vrot.slane %v821, 4
    %v823 = vadd.f32 %v821, %v822
    %v824 = vrot.slane %v823, 2
    %v825 = vadd.f32 %v823, %v824
    %v826 = vrot.slane %v825, 1
    %v827 = vadd.f32 %v825, %v826
    %v828 = vmul.f32 %v827, 10.0
    %v829 = vmul.f32 %v828, 1.442695
    %v830 = vpow.pop %v829
    %v831 = vmul.f32 %v251, %v347
    %v832 = vmul.f32 %v252, %v348
    %v833 = vmul.f32 %v253, %v349
    %v834 = vmul.f32 %v254, %v350
    %v835 = vsel %vm98, %v831, 0.0
    %v836 = vsel %vm98, %v832, 0.0
    %v837 = vadd.f32 %v835, %v836
    %v838 = vsel %vm98, %v833, 0.0
    %v839 = vadd.f32 %v837, %v838
    %v840 = vsel %vm98, %v834, 0.0
    %v841 = vadd.f32 %v839, %v840
    %v842 = vrot.slane %v841, 4
    %v843 = vadd.f32 %v841, %v842
    %v844 = vrot.slane %v843, 2
    %v845 = vadd.f32 %v843, %v844
    %v846 = vrot.slane %v845, 1
    %v847 = vadd.f32 %v845, %v846
    %v848 = vmul.f32 %v847, 10.0
    %v849 = vmul.f32 %v848, 1.442695
    %v850 = vpow.pop %v849
    %v851 = vmul.f32 %v283, %v315
    %v852 = vmul.f32 %v284, %v316
    %v853 = vmul.f32 %v285, %v317
    %v854 = vmul.f32 %v286, %v318
    %v855 = vsel %vm98, %v851, 0.0
    %v856 = vsel %vm98, %v852, 0.0
    %v857 = vadd.f32 %v855, %v856
    %v858 = vsel %vm98, %v853, 0.0
    %v859 = vadd.f32 %v857, %v858
    %v860 = vsel %vm98, %v854, 0.0
    %v861 = vadd.f32 %v859, %v860
    %v862 = vrot.slane %v861, 4
    %v863 = vadd.f32 %v861, %v862
    %v864 = vrot.slane %v863, 2
    %v865 = vadd.f32 %v863, %v864
    %v866 = vrot.slane %v865, 1
    %v867 = vadd.f32 %v865, %v866
    %v868 = vmul.f32 %v867, 10.0
    %v869 = vmul.f32 %v868, 1.442695
    %v870 = vpow.pop %v869
    %v871 = vmul.f32 %v283, %v347
    %v872 = vmul.f32 %v284, %v348
    %v873 = vmul.f32 %v285, %v349
    %v874 = vmul.f32 %v286, %v350
    %v875 = vsel %vm98, %v871, 0.0
    %v876 = vsel %vm98, %v872, 0.0
    %v877 = vadd.f32 %v875, %v876
    %v878 = vsel %vm98, %v873, 0.0
    %v879 = vadd.f32 %v877, %v878
    %v880 = vsel %vm98, %v874, 0.0
    %v881 = vadd.f32 %v879, %v880
    %v882 = vrot.slane %v881, 4
    %v883 = vadd.f32 %v881, %v882
    %v884 = vrot.slane %v883, 2
    %v885 = vadd.f32 %v883, %v884
    %v886 = vrot.slane %v885, 1
    %v887 = vadd.f32 %v885, %v886
    %v888 = vmul.f32 %v887, 10.0
    %v889 = vmul.f32 %v888, 1.442695
    %v890 = vpow.pop %v889
    %v891 = vmul.f32 %v315, %v347
    %v892 = vmul.f32 %v316, %v348
    %v893 = vmul.f32 %v317, %v349
    %v894 = vmul.f32 %v318, %v350
    %v895 = vsel %vm98, %v891, 0.0
    %v896 = vsel %vm98, %v892, 0.0
    %v897 = vadd.f32 %v895, %v896
    %v898 = vsel %vm98, %v893, 0.0
    %v899 = vadd.f32 %v897, %v898
    %v900 = vsel %vm98, %v894, 0.0
    %v901 = vadd.f32 %v899, %v900
    %v902 = vrot.slane %v901, 4
    %v903 = vadd.f32 %v901, %v902
    %v904 = vrot.slane %v903, 2
    %v905 = vadd.f32 %v903, %v904
    %v906 = vrot.slane %v905, 1
    %v907 = vadd.f32 %v905, %v906
    %v908 = vmul.f32 %v907, 10.0
    %v909 = vmul.f32 %v908, 1.442695
    %v910 = vpow.pop %v909
    %v911 = vadd.f32 %v510, %v530
    %v912 = vadd.f32 %v911, %v550
    %v913 = vadd.f32 %v912, %v570
    %v914 = vadd.f32 %v913, %v590
    %v915 = vadd.f32 %v914, %v610
    %v916 = vadd.f32 %v915, %v478
    %v917 = vlog2.pop %v916
    %v918 = vmul.f32 %v917, 0.6931472
    %v919 = vsub.f32 %v918, %v368
    %v920 = vadd.f32 %v919, 0.0
    %v921 = vlog2.pop %v915
    %v922 = vmul.f32 %v921, 0.6931472
    %v923 = vsub.f32 %v918, %v922
    %v924 = vadd.f32 %v923, 0.0
    %v925 = vadd.f32 %v510, %v630
    %v926 = vadd.f32 %v925, %v650
    %v927 = vadd.f32 %v926, %v670
    %v928 = vadd.f32 %v927, %v690
    %v929 = vadd.f32 %v928, %v710
    %v930 = vadd.f32 %v929, %v480
    %v931 = vlog2.pop %v930
    %v932 = vmul.f32 %v931, 0.6931472
    %v933 = vsub.f32 %v932, %v386
    %v934 = vadd.f32 %v920, %v933
    %v935 = vlog2.pop %v929
    %v936 = vmul.f32 %v935, 0.6931472
    %v937 = vsub.f32 %v932, %v936
    %v938 = vadd.f32 %v924, %v937
    %v939 = vadd.f32 %v530, %v630
    %v940 = vadd.f32 %v939, %v730
    %v941 = vadd.f32 %v940, %v750
    %v942 = vadd.f32 %v941, %v770
    %v943 = vadd.f32 %v942, %v790
    %v944 = vadd.f32 %v943, %v482
    %v945 = vlog2.pop %v944
    %v946 = vmul.f32 %v945, 0.6931472
    %v947 = vsub.f32 %v946, %v404
    %v948 = vadd.f32 %v934, %v947
    %v949 = vlog2.pop %v943
    %v950 = vmul.f32 %v949, 0.6931472
    %v951 = vsub.f32 %v946, %v950
    %v952 = vadd.f32 %v938, %v951
    %v953 = vadd.f32 %v550, %v650
    %v954 = vadd.f32 %v953, %v730
    %v955 = vadd.f32 %v954, %v810
    %v956 = vadd.f32 %v955, %v830
    %v957 = vadd.f32 %v956, %v850
    %v958 = vadd.f32 %v957, %v484
    %v959 = vlog2.pop %v958
    %v960 = vmul.f32 %v959, 0.6931472
    %v961 = vsub.f32 %v960, %v422
    %v962 = vadd.f32 %v948, %v961
    %v963 = vlog2.pop %v957
    %v964 = vmul.f32 %v963, 0.6931472
    %v965 = vsub.f32 %v960, %v964
    %v966 = vadd.f32 %v952, %v965
    %v967 = vadd.f32 %v570, %v670
    %v968 = vadd.f32 %v967, %v750
    %v969 = vadd.f32 %v968, %v810
    %v970 = vadd.f32 %v969, %v870
    %v971 = vadd.f32 %v970, %v890
    %v972 = vadd.f32 %v971, %v486
    %v973 = vlog2.pop %v972
    %v974 = vmul.f32 %v973, 0.6931472
    %v975 = vsub.f32 %v974, %v440
    %v976 = vadd.f32 %v962, %v975
    %v977 = vlog2.pop %v971
    %v978 = vmul.f32 %v977, 0.6931472
    %v979 = vsub.f32 %v974, %v978
    %v980 = vadd.f32 %v966, %v979
    %v981 = vadd.f32 %v590, %v690
    %v982 = vadd.f32 %v981, %v770
    %v983 = vadd.f32 %v982, %v830
    %v984 = vadd.f32 %v983, %v870
    %v985 = vadd.f32 %v984, %v910
    %v986 = vadd.f32 %v985, %v488
    %v987 = vlog2.pop %v986
    %v988 = vmul.f32 %v987, 0.6931472
    %v989 = vsub.f32 %v988, %v458
    %v990 = vadd.f32 %v976, %v989
    %v991 = vlog2.pop %v985
    %v992 = vmul.f32 %v991, 0.6931472
    %v993 = vsub.f32 %v988, %v992
    %v994 = vadd.f32 %v980, %v993
    %v995 = vadd.f32 %v610, %v710
    %v996 = vadd.f32 %v995, %v790
    %v997 = vadd.f32 %v996, %v850
    %v998 = vadd.f32 %v997, %v890
    %v999 = vadd.f32 %v998, %v910
    %v1000 = vadd.f32 %v999, %v490
    %v1001 = vlog2.pop %v1000
    %v1002 = vmul.f32 %v1001, 0.6931472
    %v1003 = vsub.f32 %v1002, %v476
    %v1004 = vadd.f32 %v990, %v1003
    %v1005 = vlog2.pop %v999
    %v1006 = vmul.f32 %v1005, 0.6931472
    %v1007 = vsub.f32 %v1002, %v1006
    %v1008 = vadd.f32 %v994, %v1007
    %v1009 = vmul.f32 %v1004, 0.07341405
    %vm1010 = vcmask 8192
    %1011 = vst.msk [vmem:[#allocation5] sm:$0x1] %vm1010, %v1009
    %v1012 = vmul.f32 %v1008, 0.07341405
    %1013 = vst.msk [vmem:[#allocation5 + $0x1] sm:$0x1] %vm1010, %v1012
    // Predicated region
    $region10: #{tpu_custom_call.1} parent=1 // pred_check
      _
    $region11: #{tpu_custom_call.1} parent=1 // pred_check_branch
      %1015 = sbr.rel (0) target = $region13
    $region12: #{tpu_custom_call.1} parent=1 // pred_region
      %1017 = vsyncadd [#allocation4], 0
      %s1019 = sshll.u32 [#allocation5], 4
      %s1020 = int_to_ptr.vmem [resolvable:$true] %s1019
      %s1021 = sshll.u32 %s1, 4
      %s1022 = int_to_ptr.hbm [resolvable:$true] %s1021
      %1024 = dma.vmem_to_hbm [thread:$0]  %s1020, 32, %s1022, [#allocation4]
    $region13: #{tpu_custom_call.1} parent=1 // pred_fallthru
      _
    // Predicated region
    $region14: #{tpu_custom_call.1} parent=1 // pred_check
      _
    $region15: #{tpu_custom_call.1} parent=1 // pred_check_branch
      %1026 = sbr.rel (0) target = $region17
    $region16: #{tpu_custom_call.1} parent=1 // pred_region
      %1028 = dma.done [#allocation4], 32
    $region17: #{tpu_custom_call.1} parent=1 // pred_fallthru
      _
    %1029 = vsyncpa [#allocation3], 1
    %1030 = vsyncpa [#allocation4], 1

</llo_original>
